<compile_context>
chip_gen: v7x
topology: tpu7x:2x2x1
jax: 0.10.0
libtpu: 0.0.40
codegen_flags: <defaults>
</compile_context>

<pallas_src>
import functools

import jax
import jax.numpy as jnp
from jax.experimental import pallas as pl
from jax.experimental.pallas import tpu as pltpu


def _round_up(x, m):
    return ((x + m - 1) // m) * m


def _bpr_kernel(u_ref, pn_ref, out_ref, acc_ref, *, batch_size, tile_b):
    i = pl.program_id(0)

    @pl.when(i == 0)
    def _():
        acc_ref[...] = jnp.zeros_like(acc_ref)

    u = u_ref[...].astype(jnp.float32)
    pn = pn_ref[...].astype(jnp.float32)

    # pos_scores - neg_scores == sum(u * (pos - neg), axis=1)
    diff = jnp.sum(u * pn, axis=1, keepdims=True)                 # (TB, 1)

    # Numerically stable log(sigmoid(x)) = min(x, 0) - log(1 + exp(-|x|)).
    log_sig = jnp.minimum(diff, 0.0) - jnp.log(1.0 + jnp.exp(-jnp.abs(diff)))

    # Mask out zero-padded rows of the (possibly ragged) last tile.
    row = i * tile_b + jax.lax.broadcasted_iota(jnp.int32, diff.shape, 0)
    contrib = jnp.where(row < batch_size, log_sig, 0.0)

    acc_ref[...] += jnp.sum(contrib, keepdims=True)               # (1, 1)

    @pl.when(i == pl.num_programs(0) - 1)
    def _():
        out_ref[...] = -(acc_ref[...] * (1.0 / batch_size))


def bpr_loss_pallas(u_e, pos_e, neg_e):
    B, D = u_e.shape

    # Done in the gather glue so the kernel only streams 2 arrays, not 3.
    pn_e = (pos_e - neg_e).astype(u_e.dtype)

    tile_b = min(1024, _round_up(B, 8))
    b_pad = _round_up(B, tile_b)
    if b_pad != B:
        u_e = jnp.pad(u_e, ((0, b_pad - B), (0, 0)))
        pn_e = jnp.pad(pn_e, ((0, b_pad - B), (0, 0)))
    num_tiles = b_pad // tile_b

    kernel = functools.partial(_bpr_kernel, batch_size=B, tile_b=tile_b)

    cost = pl.CostEstimate(
        flops=4 * B * D,
        transcendentals=2 * B,
        bytes_accessed=2 * B * D * 4 + 4,
    )

    out = pl.pallas_call(
        kernel,
        out_shape=jax.ShapeDtypeStruct((1, 1), jnp.float32),
        grid_spec=pltpu.PrefetchScalarGridSpec(
            num_scalar_prefetch=0,
            grid=(num_tiles,),
            in_specs=[
                pl.BlockSpec((tile_b, D), lambda i: (i, 0)),
                pl.BlockSpec((tile_b, D), lambda i: (i, 0)),
            ],
            out_specs=pl.BlockSpec((1, 1), lambda i: (0, 0)),
            scratch_shapes=[pltpu.VMEM((1, 1), jnp.float32)],
        ),
        compiler_params=pltpu.CompilerParams(
            dimension_semantics=("arbitrary",),  # carried (1,1) accumulator
            vmem_limit_bytes=32 * 1024 * 1024,
        ),
        cost_estimate=cost,
    )(u_e, pn_e)
    return out[0, 0]


def xavier_uniform(key, shape):
    # Matches torch.nn.init.xavier_uniform_ for a 2-D parameter.
    fan_in, fan_out = shape[0], shape[1]
    bound = jnp.sqrt(6.0 / (fan_in + fan_out))
    return jax.random.uniform(key, shape, jnp.float32, -bound, bound)


def agent_forward(all_embed, user, pos_item, neg_item):
    """Equivalent of Agent.forward(user, pos_item, neg_item)."""
    u_e = all_embed[user]        # (B, D) gather -- glue in plain JAX
    pos_e = all_embed[pos_item]  # (B, D)
    neg_e = all_embed[neg_item]  # (B, D)
    return bpr_loss_pallas(u_e, pos_e, neg_e)


if __name__ == "__main__":
    # Small synthetic config consistent with the module:
    #   data_config: n_users, n_items; args_config: emb_size, batch_size.
    n_users = 8
    n_items = 16
    emb_size = 32
    batch = 8

    key = jax.random.PRNGKey(0)
    k_embed, k_u, k_p, k_n = jax.random.split(key, 4)

    # Deterministic parameter init (xavier uniform, like _init_weight).
    all_embed = xavier_uniform(k_embed, (n_users + n_items, emb_size))

    user = jax.random.randint(k_u, (batch,), 0, n_users)
    pos_item = jax.random.randint(k_p, (batch,), n_users, n_users + n_items)
    neg_item = jax.random.randint(k_n, (batch,), n_users, n_users + n_items)

    loss = jax.jit(agent_forward)(all_embed, user, pos_item, neg_item)
    jax.block_until_ready(loss)

    # Pure-JAX reference for a sanity check.
    u_e = all_embed[user]
    pos_e = all_embed[pos_item]
    neg_e = all_embed[neg_item]
    ref = -jnp.mean(
        jnp.log(jax.nn.sigmoid(jnp.sum(u_e * pos_e, 1) - jnp.sum(u_e * neg_e, 1)))
    )
    assert jnp.allclose(loss, ref, atol=1e-5, rtol=1e-5), (loss, ref)

    print("KERNEL_OK")
</pallas_src>

<mosaic_0001>
module attributes {stable_mosaic.version = 11 : i64} {
  func.func @_bpr_kernel(%arg0: i32, %arg1: memref<8x32xf32, #tpu.memory_space<vmem>>, %arg2: memref<8x32xf32, #tpu.memory_space<vmem>>, %arg3: memref<1x1xf32, #tpu.memory_space<vmem>>, %arg4: memref<1x1xf32, #tpu.memory_space<vmem>>) attributes {dimension_semantics = [#tpu.dimension_semantics<arbitrary>], iteration_bounds = array<i64: 1>, scalar_prefetch = 0 : i64, scratch_operands = 1 : i64, tpu.core_type = #tpu.core_type<tc>, window_params = [{transform_indices = @transform_0, window_bounds = array<i64: 8, 32>}, {transform_indices = @transform_1, window_bounds = array<i64: 8, 32>}, {pipeline_mode = #tpu.pipeline_mode<synchronous>, transform_indices = @transform_2, window_bounds = array<i64: 1, 1>}]} {
    %c0_i32 = arith.constant 0 : i32
    %0 = arith.cmpi eq, %arg0, %c0_i32 : i32
    %1 = arith.extui %0 : i1 to i32
    %c0_i32_0 = arith.constant 0 : i32
    %2 = arith.cmpi ne, %1, %c0_i32_0 : i32
    scf.if %2 {
      %cst_16 = arith.constant 0.000000e+00 : f32
      %37 = vector.broadcast %cst_16 : f32 to vector<1x1xf32>
      %c0_17 = arith.constant 0 : index
      %c0_18 = arith.constant 0 : index
      %38 = vector.load %arg4[%c0_17, %c0_18] : memref<1x1xf32, #tpu.memory_space<vmem>>, vector<1x1xf32>
      tpu.vector_store %arg4[%c0_17, %c0_18], %37 {strides = array<i32>} : memref<1x1xf32, #tpu.memory_space<vmem>>, vector<1x1xf32>,
    } else {
    }
    %c0 = arith.constant 0 : index
    %c0_1 = arith.constant 0 : index
    %3 = vector.load %arg1[%c0, %c0_1] : memref<8x32xf32, #tpu.memory_space<vmem>>, vector<8x32xf32>
    %c0_2 = arith.constant 0 : index
    %c0_3 = arith.constant 0 : index
    %4 = vector.load %arg2[%c0_2, %c0_3] : memref<8x32xf32, #tpu.memory_space<vmem>>, vector<8x32xf32>
    %5 = arith.mulf %3, %4 : vector<8x32xf32>
    %cst = arith.constant dense<0.000000e+00> : vector<8xf32>
    %6 = vector.multi_reduction <add>, %5, %cst [1] : vector<8x32xf32> to vector<8xf32>
    %7 = vector.shape_cast %6 : vector<8xf32> to vector<8x1xf32>
    %cst_4 = arith.constant 0.000000e+00 : f32
    %8 = vector.broadcast %cst_4 : f32 to vector<8x1xf32>
    %9 = arith.minimumf %7, %8 : vector<8x1xf32>
    %10 = math.absf %7 : vector<8x1xf32>
    %cst_5 = arith.constant 0.000000e+00 : f32
    %11 = vector.broadcast %cst_5 : f32 to vector<8x1xf32>
    %12 = arith.subf %11, %10 : vector<8x1xf32>
    %13 = math.exp %12 : vector<8x1xf32>
    %cst_6 = arith.constant 1.000000e+00 : f32
    %14 = vector.broadcast %cst_6 : f32 to vector<8x1xf32>
    %15 = arith.addf %14, %13 : vector<8x1xf32>
    %16 = math.log %15 : vector<8x1xf32>
    %17 = arith.subf %9, %16 : vector<8x1xf32>
    %c8_i32 = arith.constant 8 : i32
    %18 = arith.muli %arg0, %c8_i32 : i32
    %19 = tpu.iota {dimensions = array<i32: 0>} : vector<8x1xi32>
    %20 = vector.broadcast %18 : i32 to vector<8x1xi32>
    %21 = arith.addi %20, %19 : vector<8x1xi32>
    %c8_i32_7 = arith.constant 8 : i32
    %22 = vector.broadcast %c8_i32_7 : i32 to vector<8x1xi32>
    %23 = arith.cmpi slt, %21, %22 : vector<8x1xi32>
    %cst_8 = arith.constant 0.000000e+00 : f32
    %24 = vector.broadcast %cst_8 : f32 to vector<8x1xf32>
    %25 = arith.select %23, %17, %24 : vector<8x1xi1>, vector<8x1xf32>
    %c0_9 = arith.constant 0 : index
    %c0_10 = arith.constant 0 : index
    %26 = vector.load %arg4[%c0_9, %c0_10] : memref<1x1xf32, #tpu.memory_space<vmem>>, vector<1x1xf32>
    %27 = vector.shape_cast %25 : vector<8x1xf32> to vector<1x8x1xf32>
    %cst_11 = arith.constant dense<0.000000e+00> : vector<1xf32>
    %28 = vector.multi_reduction <add>, %27, %cst_11 [1, 2] : vector<1x8x1xf32> to vector<1xf32>
    %29 = vector.shape_cast %28 : vector<1xf32> to vector<1x1x1xf32>
    %30 = vector.extract %29[0, 0, 0] : f32 from vector<1x1x1xf32>
    %31 = vector.broadcast %30 : f32 to vector<1x1xf32>
    %32 = arith.addf %26, %31 : vector<1x1xf32>
    %c0_12 = arith.constant 0 : index
    %c0_13 = arith.constant 0 : index
    %33 = vector.load %arg4[%c0_12, %c0_13] : memref<1x1xf32, #tpu.memory_space<vmem>>, vector<1x1xf32>
    tpu.vector_store %arg4[%c0_12, %c0_13], %32 {strides = array<i32>} : memref<1x1xf32, #tpu.memory_space<vmem>>, vector<1x1xf32>,
    %c0_i32_14 = arith.constant 0 : i32
    %34 = arith.cmpi eq, %arg0, %c0_i32_14 : i32
    %35 = arith.extui %34 : i1 to i32
    %c0_i32_15 = arith.constant 0 : i32
    %36 = arith.cmpi ne, %35, %c0_i32_15 : i32
    scf.if %36 {
      %c0_16 = arith.constant 0 : index
      %c0_17 = arith.constant 0 : index
      %37 = vector.load %arg4[%c0_16, %c0_17] : memref<1x1xf32, #tpu.memory_space<vmem>>, vector<1x1xf32>
      %cst_18 = arith.constant 1.250000e-01 : f32
      %38 = vector.broadcast %cst_18 : f32 to vector<1x1xf32>
      %39 = arith.mulf %37, %38 : vector<1x1xf32>
      %cst_19 = arith.constant 0.000000e+00 : f32
      %40 = vector.broadcast %cst_19 : f32 to vector<1x1xf32>
      %41 = arith.subf %40, %39 : vector<1x1xf32>
      %c0_20 = arith.constant 0 : index
      %c0_21 = arith.constant 0 : index
      %42 = vector.load %arg3[%c0_20, %c0_21] : memref<1x1xf32, #tpu.memory_space<vmem>>, vector<1x1xf32>
      tpu.vector_store %arg3[%c0_20, %c0_21], %41 {strides = array<i32>} : memref<1x1xf32, #tpu.memory_space<vmem>>, vector<1x1xf32>,
    } else {
    }
    return
  }
  func.func @transform_0(%arg0: i32) -> (i32, i32) {
    %c0_i32 = arith.constant 0 : i32
    %c0_i32_0 = arith.constant 0 : i32
    return %arg0, %c0_i32 : i32, i32
  }
  func.func @transform_1(%arg0: i32) -> (i32, i32) {
    %c0_i32 = arith.constant 0 : i32
    %c0_i32_0 = arith.constant 0 : i32
    return %arg0, %c0_i32 : i32, i32
  }
  func.func @transform_2(%arg0: i32) -> (i32, i32) {
    %c0_i32 = arith.constant 0 : i32
    %c0_i32_0 = arith.constant 0 : i32
    %c0_i32_1 = arith.constant 0 : i32
    return %c0_i32, %c0_i32_0 : i32, i32
  }
}

</mosaic_0001>

<llo_original>
// kernel: sub.1
$region0: #{sub.1}
  #allocation0 [shape = 's32[1]{0}', space=sflag, size = 0x4, scoped, tag = 'scoped memory for sub.1']
  %s0 = inlined_call_operand.vmem [shape: f32[8,32], index: 0, kind: input, shape index: {}]
  %s1 = inlined_call_operand.vmem [shape: f32[8,32], index: 1, kind: input, shape index: {}]
  %s2 = inlined_call_operand.vmem [shape: f32[8,32], index: 2, kind: output, shape index: {}]
  %v3 = vld [vmem:[%s0] sm:$0xff]
  %v4 = vld [vmem:[%s1] sm:$0xff]
  %5 = xla_tuple %v3, %v4
  %6 = xla_tuple %5
  %v7 = vsub.f32 %v3, %v4
  %8 = xla_tuple %v7
  %9 = vst [vmem:[%s2] sm:$0xff] %v7

// kernel: agent_forward.1
$region0: #{agent_forward.1}
  #allocation0 [shape = 'u32[]', space=smem, size = 0x4, offset = 0x4, fixed_abs, tag = 'smem constant byte address 0x4 - core index']
  #allocation1 [shape = 'u32[144,128]{1,0:T(1,128)}', space=vmem, size = 0x12000, scoped, tag = 'internal scratch']
  #allocation2 [shape = 'f32[1,1]{1,0:T(1,128)}', space=vmem, size = 0x200, scoped, tag = 'scratch operand']
  %s0 = inlined_call_operand.vmem [shape: f32[8,32], index: 0, kind: input, shape index: {}]
  %s1 = inlined_call_operand.vmem [shape: f32[8,32], index: 1, kind: input, shape index: {}]
  %s2 = inlined_call_operand.hbm [shape: f32[1,1], index: 2, kind: output, shape index: {}]
  %s3 = sld [smem:[#allocation0]]
  $region26: #{agent_forward.1} parent=0
    _
  %s5 = ssub.s32 1, %s3
  %s6 = scalar_select 0, %s5, %s3
  $region1: #{agent_forward.1} parent=0
    #allocation3 [shape = 'u8[512]{0}', space=vmem, size = 0x400, scoped, tag = 'output window, operand 0, single buffered']
    #allocation4 [shape = 's32[1]{0}', space=sflag, size = 0x4, scoped, tag = 'scoped memory for agent_forward.1']
    %7 = vsyncpa [#allocation4], 0
    // Predicated region
    $region2: #{agent_forward.1} parent=1 // pred_check
      _
    $region3: #{agent_forward.1} parent=1 // pred_check_branch
      %9 = sbr.rel (0) target = $region5
    $region4: #{agent_forward.1} parent=1 // pred_region
      _
    $region5: #{agent_forward.1} parent=1 // pred_fallthru
      _
    // Predicated region
    $region6: #{agent_forward.1} parent=1 // pred_check
      _
    $region7: #{agent_forward.1} parent=1 // pred_check_branch
      %11 = sbr.rel (0) target = $region9
    $region8: #{agent_forward.1} parent=1 // pred_region
      _
    $region9: #{agent_forward.1} parent=1 // pred_fallthru
      _
    %p12 = scmp.eq.s32.totalorder 0, 0
    // Predicated region
    $region10: #{agent_forward.1} parent=1 // pred_check
      %p13 = pneg %p12
    $region11: #{agent_forward.1} parent=1 // pred_check_branch
      %15 = sbr.rel (%p13) target = $region13
    $region12: #{agent_forward.1} parent=1 // pred_region
      %vm16 = vcmask 0
      %17 = vst.msk [vmem:[#allocation2] sm:$0x1] %vm16, 0.0
    $region13: #{agent_forward.1} parent=1 // pred_fallthru
      _
    %v18 = vld [vmem:[%s0] sm:$0xff]
    %v19 = vld [vmem:[%s1] sm:$0xff]
    %v20 = vmul.f32 %v18, %v19
    %vm21 = vcmask 261120
    %v22 = vsel %vm21, %v20, 0.0
    %23 = vadd.xlane.f32.xlu0 %v22
    %v24 = vpop.xlane.xlu0 %23
    %v25 = vmin.f32 %v24, 0.0
    %v26 = vand.u32 2147483647, %v24
    %v27 = vsub.f32 0.0, %v26
    %v28 = vmul.f32 %v27, 1.442695
    %v29 = vpow.pop %v28
    %v30 = vadd.f32 %v29, 1.0
    %v31 = vlog2.pop %v30
    %v32 = vmul.f32 %v31, 0.6931472
    %v33 = vsub.f32 %v25, %v32
    %s34 = smul.u32 0, 8
    %v35 = vlaneseq
    %v36 = vshrl.u32 %v35, 7
    %v37 = vstv %s34
    %v38 = vadd.s32 %v37, %v36
    %vm39 = vcmp.lt.s32.totalorder %v38, 8
    %v40 = vsel %vm39, %v33, 0.0
    %v41 = vld [vmem:[#allocation2] sm:$0x1]
    %vm42 = vcmask 7168
    %v43 = vsel %vm42, %v40, 0.0
    %44 = vadd.xlane.f32.xlu0 %v43
    %v45 = vpop.xlane.xlu0 %44
    %v46 = vrot.slane %v45, 4
    %v47 = vadd.f32 %v45, %v46
    %v48 = vrot.slane %v47, 2
    %v49 = vadd.f32 %v47, %v48
    %v50 = vrot.slane %v49, 1
    %v51 = vadd.f32 %v49, %v50
    %s52 = vtos %v51
    %v53 = vstv %s52
    %v54 = vadd.f32 %v41, %v53
    %vm55 = vcmask 0
    %56 = vst.msk [vmem:[#allocation2] sm:$0x1] %vm55, %v54
    // Predicated region
    $region14: #{agent_forward.1} parent=1 // pred_check
      %p57 = pneg %p12
    $region15: #{agent_forward.1} parent=1 // pred_check_branch
      %59 = sbr.rel (%p57) target = $region17
    $region16: #{agent_forward.1} parent=1 // pred_region
      %v60 = vld [vmem:[#allocation2] sm:$0x1]
      %v61 = vmul.f32 %v60, 0.125
      %v62 = vsub.f32 0.0, %v61
      %63 = vst.msk [vmem:[#allocation3] sm:$0x1] %vm55, %v62
    $region17: #{agent_forward.1} parent=1 // pred_fallthru
      _
    // Predicated region
    $region18: #{agent_forward.1} parent=1 // pred_check
      _
    $region19: #{agent_forward.1} parent=1 // pred_check_branch
      %65 = sbr.rel (0) target = $region21
    $region20: #{agent_forward.1} parent=1 // pred_region
      %s67 = ssub.s32 16, 16
      %68 = vsyncadd [#allocation4], %s67
      %s70 = sshll.u32 [#allocation3], 4
      %s71 = int_to_ptr.vmem [resolvable:$true] %s70
      %73 = dma.vmem_to_hbm [thread:$0]  %s71, 16, %s2, [#allocation4]
    $region21: #{agent_forward.1} parent=1 // pred_fallthru
      _
    // Predicated region
    $region22: #{agent_forward.1} parent=1 // pred_check
      _
    $region23: #{agent_forward.1} parent=1 // pred_check_branch
      %75 = sbr.rel (0) target = $region25
    $region24: #{agent_forward.1} parent=1 // pred_region
      %76 = dma.done [#allocation4], 16
    $region25: #{agent_forward.1} parent=1 // pred_fallthru
      _
    %77 = vsyncpa [#allocation4], 1

</llo_original>
